<compile_context>
chip_gen: v7x
topology: tpu7x:2x2x1
jax: 0.10.0
libtpu: 0.0.40
codegen_flags: <defaults>
</compile_context>

<pallas_src>
import functools

import jax
import jax.numpy as jnp
from jax.experimental import pallas as pl
from jax.experimental.pallas import tpu as pltpu

_LANE = 128
_SMALL_BLOCK_ELEMS = (2 * 1024 * 1024) // 4   # 2 MiB of f32 per block (v7x / unknown)
_LARGE_BLOCK_ELEMS = (4 * 1024 * 1024) // 4   # 4 MiB of f32 per block (v5e / v6e)


def _round_up(x, m):
    return -(-x // m) * m


def _vmem_budget():
    """(per-block f32 element budget, vmem_limit_bytes), generation-gated."""
    try:
        info = pltpu.get_tpu_info()
        vmem = int(getattr(info, "vmem_capacity_bytes", 0) or 0)
    except Exception:
        vmem = 0
    if vmem >= 100 * 1024 * 1024:                 # v5e / v6e: 128 MiB physical VMEM
        return _LARGE_BLOCK_ELEMS, 64 * 1024 * 1024
    return _SMALL_BLOCK_ELEMS, 32 * 1024 * 1024   # v7x (64 MiB physical) or unknown


def _choose_tw(C, HW, N, max_block_elems):
    """Lane-tile width: a multiple of 128, or the full (possibly ragged) H*W."""
    cap = max(_LANE, (max_block_elems // max(C, 1)) // _LANE * _LANE)
    if HW > cap:
        return cap                                # last block partial -> masked store
    # H*W fits in one block.  Only split the lane axis when that still yields
    # >= 512-lane tiles and >= 4 blocks (2 per v7x TensorCore); otherwise keep
    # a single lane block (the batch axis already supplies grid steps if N>1).
    if N == 1 and HW >= 4 * 512:
        return min(cap, max(512, _round_up(pl.cdiv(HW, 4), _LANE)))
    return HW


def _lrn_kernel(x_ref, o_ref, *, local_size, alpha, beta):
    C, _ = x_ref.shape
    pad = (local_size - 1) // 2
    scale = float(alpha) / float(local_size)      # count_include_pad=True

    x = x_ref[...]
    sq = x * x

    if pad == 0:
        t = sq * scale + 1.0
    elif (C % 8 == 0) and (2 * pad < C):
        # Cross-channel window sum via sublane rotations on the otherwise idle
        # XLU.  Boundary masks are lane-invariant (C, 1) columns derived from a
        # rolled *narrow* iota, so the math is exact f32 and does not depend on
        # the rotation-direction convention: for a pure rotation by s,
        # |dst_row - src_row| is either the true channel offset (<= pad, keep)
        # or C minus it (> pad, wrapped, drop).
        row = jax.lax.broadcasted_iota(jnp.int32, (C, _LANE), 0)
        shifts = []
        for k in range(1, pad + 1):
            shifts.extend((k, C - k))
        acc = sq
        for s in shifts:
            rolled = pltpu.roll(sq, shift=s, axis=0)
            src = pltpu.roll(row, shift=s, axis=0)
            keep = (jnp.abs(row - src) <= pad).astype(sq.dtype)[:, :1]   # (C, 1)
            acc = acc + rolled * keep
        t = acc * scale + 1.0
    else:
        # Fallback (C not sublane-aligned or local_size > C): banded window
        # matrix on the MXU, with the alpha/local_size scale folded into w.
        ci = jax.lax.broadcasted_iota(jnp.int32, (C, C), 0)
        cj = jax.lax.broadcasted_iota(jnp.int32, (C, C), 1)
        w = (jnp.abs(ci - cj) <= pad).astype(jnp.float32) * scale
        t = jnp.dot(w, sq, preferred_element_type=jnp.float32) + 1.0

    if float(beta) == 0.75:
        # x / t**0.75 == x * rsqrt(t * sqrt(t)): sqrt/rsqrt ride the EUP,
        # the multiplies ride the VPU; avoids pow (log+exp) and a divide.
        o_ref[...] = x * jax.lax.rsqrt(t * jnp.sqrt(t))
    else:
        o_ref[...] = x / jnp.power(t, float(beta))


def lrn(x, local_size=1, alpha=1.0, beta=0.75, *, max_block_elems=None):
    """Across-channel LRN matching the PyTorch module (NCHW float32 input)."""
    assert local_size % 2 == 1, "module semantics only defined for odd local_size"
    N, C, H, W = x.shape
    HW = H * W

    if max_block_elems is None:
        max_block_elems, vmem_limit = _vmem_budget()
    else:
        vmem_limit = 32 * 1024 * 1024
    TW = _choose_tw(C, HW, N, max_block_elems)

    xr = x.reshape(N, C, HW)                      # metadata-only reshape, no HBM pass
    grid = (N, pl.cdiv(HW, TW))
    kernel = functools.partial(
        _lrn_kernel,
        local_size=int(local_size), alpha=float(alpha), beta=float(beta))

    def call(pipeline_mode):
        kw = {} if pipeline_mode is None else {"pipeline_mode": pipeline_mode}
        in_spec = pl.BlockSpec((None, C, TW), lambda n, j: (n, 0, j), **kw)
        out_spec = pl.BlockSpec((None, C, TW), lambda n, j: (n, 0, j))
        return pl.pallas_call(
            kernel,
            out_shape=jax.ShapeDtypeStruct((N, C, HW), x.dtype),
            grid_spec=pltpu.PrefetchScalarGridSpec(
                num_scalar_prefetch=0,
                grid=grid,
                in_specs=[in_spec],
                out_specs=out_spec,
            ),
            compiler_params=pltpu.CompilerParams(
                dimension_semantics=("parallel", "parallel"),
                vmem_limit_bytes=vmem_limit,
            ),
        )(xr)

    out = None
    if grid[0] * grid[1] >= 3 and hasattr(pl, "Buffered"):
        try:
            out = call(pl.Buffered(3))            # deeper pipeline on short-compute grids
        except Exception:
            out = None                            # fall back to default double-buffering
    if out is None:
        out = call(None)
    return out.reshape(N, C, H, W)


def _lrn_reference(x, local_size=1, alpha=1.0, beta=0.75):
    """Pure-JAX reference mirroring the PyTorch forward."""
    pad = (local_size - 1) // 2
    sq = x * x
    sq_pad = jnp.pad(sq, ((0, 0), (pad, pad), (0, 0), (0, 0)))
    C = x.shape[1]
    acc = sum(sq_pad[:, k:k + C] for k in range(local_size))
    div = (acc / local_size) * alpha + 1.0
    return x / jnp.power(div, beta)


if __name__ == "__main__":
    key = jax.random.PRNGKey(0)
    k0, k1, k2 = jax.random.split(key, 3)

    # Small NCHW inputs consistent with the module's conv feature maps.
    x = jax.random.normal(k0, (2, 8, 16, 16), dtype=jnp.float32)

    # Module defaults: local_size=1, alpha=1.0, beta=0.75.
    y_default = lrn(x, local_size=1, alpha=1.0, beta=0.75)
    # AlexNet-style LRN configuration used by the feature stack (roll path).
    y_lrn5 = lrn(x, local_size=5, alpha=1e-4, beta=0.75)

    # Ragged H*W (13*13=169): single full-width lane block, no wrapper pad.
    x2 = jax.random.normal(k1, (1, 16, 13, 13), dtype=jnp.float32)
    y2 = lrn(x2, local_size=5, alpha=1e-4, beta=0.75)

    # Forced small lane tile: exercises multi-step lane tiling, the masked
    # partial last block (400 = 3*128 + 16) and the Buffered(3) pipeline path.
    x3 = jax.random.normal(k2, (1, 8, 20, 20), dtype=jnp.float32)
    y3 = lrn(x3, local_size=5, alpha=1e-4, beta=0.75, max_block_elems=1024)

    jax.block_until_ready((y_default, y_lrn5, y2, y3))

    assert jnp.allclose(y_default, _lrn_reference(x, 1, 1.0, 0.75),
                        atol=1e-5, rtol=1e-5)
    assert jnp.allclose(y_lrn5, _lrn_reference(x, 5, 1e-4, 0.75),
                        atol=1e-5, rtol=1e-5)
    assert jnp.allclose(y2, _lrn_reference(x2, 5, 1e-4, 0.75),
                        atol=1e-5, rtol=1e-5)
    assert jnp.allclose(y3, _lrn_reference(x3, 5, 1e-4, 0.75),
                        atol=1e-5, rtol=1e-5)

    print("KERNEL_OK")
</pallas_src>

<mosaic_0001>
module attributes {stable_mosaic.version = 11 : i64} {
  func.func @_lrn_kernel(%arg0: i32, %arg1: i32, %arg2: memref<1x8x256xf32, #tpu.memory_space<vmem>>, %arg3: memref<1x8x256xf32, #tpu.memory_space<vmem>>) attributes {dimension_semantics = [#tpu.dimension_semantics<parallel>, #tpu.dimension_semantics<parallel>], iteration_bounds = array<i64: 2, 1>, scalar_prefetch = 0 : i64, scratch_operands = 0 : i64, tpu.core_type = #tpu.core_type<tc>, window_params = [{transform_indices = @transform_0, window_bounds = array<i64: 1, 8, 256>}, {transform_indices = @transform_1, window_bounds = array<i64: 1, 8, 256>}]} {
    %c0 = arith.constant 0 : index
    %c0_0 = arith.constant 0 : index
    %c0_1 = arith.constant 0 : index
    %0 = vector.load %arg2[%c0, %c0_0, %c0_1] : memref<1x8x256xf32, #tpu.memory_space<vmem>>, vector<1x8x256xf32>
    %1 = vector.shape_cast %0 : vector<1x8x256xf32> to vector<8x256xf32>
    %2 = arith.mulf %1, %1 : vector<8x256xf32>
    %cst = arith.constant 1.000000e+00 : f32
    %3 = vector.broadcast %cst : f32 to vector<8x256xf32>
    %4 = arith.mulf %2, %3 : vector<8x256xf32>
    %cst_2 = arith.constant 1.000000e+00 : f32
    %5 = vector.broadcast %cst_2 : f32 to vector<8x256xf32>
    %6 = arith.addf %4, %5 : vector<8x256xf32>
    %7 = math.sqrt %6 : vector<8x256xf32>
    %8 = arith.mulf %6, %7 : vector<8x256xf32>
    %9 = math.rsqrt %8 : vector<8x256xf32>
    %10 = arith.mulf %1, %9 : vector<8x256xf32>
    %c0_3 = arith.constant 0 : index
    %c0_4 = arith.constant 0 : index
    %c0_5 = arith.constant 0 : index
    %11 = vector.load %arg3[%c0_3, %c0_4, %c0_5] : memref<1x8x256xf32, #tpu.memory_space<vmem>>, vector<1x8x256xf32>
    %12 = vector.shape_cast %11 : vector<1x8x256xf32> to vector<8x256xf32>
    %13 = vector.shape_cast %10 : vector<8x256xf32> to vector<1x8x256xf32>
    tpu.vector_store %arg3[%c0_3, %c0_4, %c0_5], %13 {strides = array<i32>} : memref<1x8x256xf32, #tpu.memory_space<vmem>>, vector<1x8x256xf32>,
    return
  }
  func.func @transform_0(%arg0: i32, %arg1: i32) -> (i32, i32, i32) {
    %c0_i32 = arith.constant 0 : i32
    %c0_i32_0 = arith.constant 0 : i32
    return %arg0, %c0_i32, %arg1 : i32, i32, i32
  }
  func.func @transform_1(%arg0: i32, %arg1: i32) -> (i32, i32, i32) {
    %c0_i32 = arith.constant 0 : i32
    %c0_i32_0 = arith.constant 0 : i32
    return %arg0, %c0_i32, %arg1 : i32, i32, i32
  }
}

</mosaic_0001>

<llo_original>
// kernel: tpu_custom_call.1
$region0: #{tpu_custom_call.1}
  #allocation0 [shape = 'u32[]', space=smem, size = 0x4, offset = 0x4, fixed_abs, tag = 'smem constant byte address 0x4 - core index']
  #allocation1 [shape = 'u32[144,128]{1,0:T(1,128)}', space=vmem, size = 0x12000, scoped, tag = 'internal scratch']
  %s0 = inlined_call_operand.hbm [shape: f32[2,8,256], index: 0, kind: input, shape index: {}]
  %s1 = inlined_call_operand.hbm [shape: f32[2,8,256], index: 1, kind: output, shape index: {}]
  %s2 = sld [smem:[#allocation0]]
  $region41: #{tpu_custom_call.1} parent=0
    _
  %s4 = ssub.s32 1, %s2
  %s5 = scalar_select 0, %s4, %s2
  $region1: #{tpu_custom_call.1} parent=0
    #allocation2 [shape = 'u8[16384]{0}', space=vmem, size = 0x4000, scoped, tag = 'input window, operand 0']
    #allocation3 [shape = 's32[2]{0}', space=sflag, size = 0x8, scoped, tag = 'scoped memory for tpu_custom_call.1']
    #allocation4 [shape = 's32[2]{0}', space=sflag, size = 0x8, scoped, tag = 'scoped memory for tpu_custom_call.1']
    #allocation5 [shape = 'u8[16384]{0}', space=vmem, size = 0x4000, scoped, tag = 'output window, operand 0']
    %6 = vsyncpa [#allocation3], 0
    %s7 = scalar_lea.sflag [#allocation3], 1
    %8 = vsyncpa %s7, 0
    %9 = vsyncpa [#allocation4], 0
    %s10 = scalar_lea.sflag [#allocation4], 1
    %11 = vsyncpa %s10, 0
    loop: start=0, step=1, limit=4
    $region2: #{tpu_custom_call.1} parent=1 // loop_pre_header
      _
    $region3: #{tpu_custom_call.1} parent=1 // loop_header
      %s13 = sphi 0, %s17
      %p14 = scmp.ge.s32.totalorder %s13, 4
      %s20 = sphi 0, %s32
      %s21 = sphi 0, %s28
      %s22 = sphi 0, %s20
      %s23 = sphi 0, %s21
      %s24 = sphi 0, %s22
      %s25 = sphi 0, %s23
      %s37 = sphi 0, %s39
      %s40 = sphi 0, %s37
      %s41 = sphi 0, %s40
      %s57 = sphi 0, %s41
      %s65 = sphi 0, %s67
      %s68 = sphi 0, %s65
      %s69 = sphi 0, %s68
      %s85 = sphi 0, %s69
    $region4: #{tpu_custom_call.1} parent=1 // loop_header_branch
      %16 = sbr.rel (%p14) target = $region8
    $region5: #{tpu_custom_call.1} parent=1 // loop_body
      %s18 = ssub.s32 %s13, 1
      %s19 = ssub.s32 %s13, 2
      %s26 = sadd.s32 1, %s21
      %p27 = scmp.ge.s32.totalorder %s26, 1
      %s28 = scalar_select %p27, 0, %s26
      %s29 = sadd.s32 1, %s20
      %s30 = scalar_select %p27, %s29, %s20
      %p31 = scmp.ge.s32.totalorder %s30, 2
      %s32 = scalar_select %p31, 0, %s30
      %s33 = ssub.s32 %s20, %s32
      %s34 = ssub.s32 %s21, %s28
      %s35 = sor.u32 %s33, %s34
      %p36 = scmp.eq.s32.totalorder %s35, 0
      %s38 = sadd.s32 %s37, 1
      %s39 = scalar_select %p36, %s37, %s38
      %p42 = pneg %p36
      %p43 = scmp.eq.s32.totalorder %s13, 1
      %p44 = por %p42, %p43
      %p45 = scmp.ne.s32.totalorder %s37, %s40
      %p46 = scmp.eq.s32.totalorder %s13, 0
      %p47 = por %p45, %p46
      %p48 = scmp.ne.s32.totalorder %s37, %s40
      %p49 = scmp.eq.s32.totalorder %s18, 1
      %p50 = por %p48, %p49
      %p51 = scmp.ne.s32.totalorder %s40, %s41
      %p52 = scmp.eq.s32.totalorder %s18, 0
      %p53 = por %p51, %p52
      %p54 = scmp.ne.s32.totalorder %s40, %s41
      %p55 = scmp.eq.s32.totalorder %s19, 1
      %p56 = por %p54, %p55
      %p58 = scmp.ne.s32.totalorder %s41, %s57
      %p59 = scmp.eq.s32.totalorder %s19, 0
      %p60 = por %p58, %p59
      %s61 = ssub.s32 %s20, %s32
      %s62 = ssub.s32 %s21, %s28
      %s63 = sor.u32 %s61, %s62
      %p64 = scmp.eq.s32.totalorder %s63, 0
      %s66 = sadd.s32 %s65, 1
      %s67 = scalar_select %p64, %s65, %s66
      %p70 = pneg %p64
      %p71 = scmp.eq.s32.totalorder %s13, 1
      %p72 = por %p70, %p71
      %p73 = scmp.ne.s32.totalorder %s65, %s68
      %p74 = scmp.eq.s32.totalorder %s13, 0
      %p75 = por %p73, %p74
      %p76 = scmp.ne.s32.totalorder %s65, %s68
      %p77 = scmp.eq.s32.totalorder %s18, 1
      %p78 = por %p76, %p77
      %p79 = scmp.ne.s32.totalorder %s68, %s69
      %p80 = scmp.eq.s32.totalorder %s18, 0
      %p81 = por %p79, %p80
      %p82 = scmp.ne.s32.totalorder %s68, %s69
      %p83 = scmp.eq.s32.totalorder %s19, 1
      %p84 = por %p82, %p83
      %p86 = scmp.ne.s32.totalorder %s69, %s85
      %p87 = scmp.eq.s32.totalorder %s19, 0
      %p88 = por %p86, %p87
      %p89 = scmp.le.s32.totalorder 1, %s13
      %p90 = scmp.lt.s32.totalorder %s13, 3
      %p91 = pnand %p89, %p90
      %p92 = pneg %p91
      // Predicated region
      $region9: #{tpu_custom_call.1} parent=5 // pred_check
        _
      $region10: #{tpu_custom_call.1} parent=5 // pred_check_branch
        %94 = sbr.rel (%p91) target = $region12
      $region11: #{tpu_custom_call.1} parent=5 // pred_region
        %s95 = ssub.s32 %s13, 1
      $region12: #{tpu_custom_call.1} parent=5 // pred_fallthru
        _
      %p96 = scmp.lt.s32.totalorder %s13, 2
      // Predicated region
      $region13: #{tpu_custom_call.1} parent=5 // pred_check
        %p97 = pneg %p96
      $region14: #{tpu_custom_call.1} parent=5 // pred_check_branch
        %99 = sbr.rel (%p97) target = $region16
      $region15: #{tpu_custom_call.1} parent=5 // pred_region
        // Predicated region
        $region17: #{tpu_custom_call.1} parent=15 // pred_check
          %p100 = pneg %p47
        $region18: #{tpu_custom_call.1} parent=15 // pred_check_branch
          %102 = sbr.rel (%p100) target = $region20
        $region19: #{tpu_custom_call.1} parent=15 // pred_region
          %s103 = sand.u32 %s37, 1
          %s104 = scalar_lea.sflag [#allocation3], %s103
          %s105 = sand.u32 %s37, 1
          %s106 = smul.addr %s105, 16
          %s107 = scalar_lea.vmem [#allocation2], %s106
          %s108 = smul.u32 2, %s21
          %s110 = ssub.s32 256, 256
          %111 = vsyncadd %s104, %s110
          %s112 = smul.addr %s20, 2
          %s113 = sadd.s32 %s108, %s112
          %s114 = smul.addr %s113, 128
          %s115 = scalar_lea.hbm %s0, %s114
          %s117 = sshll.u32 %s107, 4
          %s118 = int_to_ptr.vmem [resolvable:$true] %s117
          %120 = dma.hbm_to_vmem [thread:$0]  %s115, 256, %s118, %s104
        $region20: #{tpu_custom_call.1} parent=15 // pred_fallthru
          _
      $region16: #{tpu_custom_call.1} parent=5 // pred_fallthru
        _
      %p121 = scmp.le.s32.totalorder 1, %s13
      %p122 = scmp.lt.s32.totalorder %s13, 3
      %p123 = pnand %p121, %p122
      %p124 = pneg %p123
      // Predicated region
      $region21: #{tpu_custom_call.1} parent=5 // pred_check
        _
      $region22: #{tpu_custom_call.1} parent=5 // pred_check_branch
        %126 = sbr.rel (%p123) target = $region24
      $region23: #{tpu_custom_call.1} parent=5 // pred_region
        %s127 = ssub.s32 %s13, 1
        %s128 = sand.u32 %s40, 1
        %s129 = scalar_lea.sflag [#allocation3], %s128
        %s130 = sand.u32 %s40, 1
        %s131 = smul.addr %s130, 16
        %s132 = scalar_lea.vmem [#allocation2], %s131
        // Predicated region
        $region25: #{tpu_custom_call.1} parent=23 // pred_check
          %p133 = pneg %p53
        $region26: #{tpu_custom_call.1} parent=23 // pred_check_branch
          %135 = sbr.rel (%p133) target = $region28
        $region27: #{tpu_custom_call.1} parent=23 // pred_region
          %136 = dma.done %s129, 256
        $region28: #{tpu_custom_call.1} parent=23 // pred_fallthru
          _
        %s137 = sand.u32 %s40, 1
        %s138 = scalar_lea.sflag [#allocation3], %s137
        %s139 = sand.u32 %s40, 1
        %s140 = smul.addr %s139, 16
        %s141 = scalar_lea.vmem [#allocation2], %s140
        %p142 = pneg %p53
        %p143 = pneg %p50
        %p144 = pneg %p81
        %p145 = pneg %p78
        %s146 = sand.u32 %s68, 1
        %s147 = scalar_lea.sflag [#allocation4], %s146
        %s148 = sand.u32 %s68, 1
        %s149 = smul.addr %s148, 16
        %s150 = scalar_lea.vmem [#allocation5], %s149
        %s151 = smul.u32 2, %s23
        %s152 = smul.u32 2, %s23
        %v153 = vld [vmem:[%s132] sm:$0xff]
        %v154 = vld [vmem:[%s132 + $0x8] sm:$0xff]
        %v155 = vmul.f32 %v153, %v153
        %v156 = vmul.f32 %v154, %v154
        %v157 = vadd.f32 %v155, 1.0
        %v158 = vadd.f32 %v156, 1.0
        %v159 = vrsqrt.pop %v157
        %v160 = vmul.f32 %v157, %v159
        %vm161 = vcmp.eq.f32.partialorder %v157, inf
        %v162 = vsel %vm161, %v157, %v160
        %vm163 = vcmp.eq.f32.partialorder %v157, 0.0
        %v164 = vand.u32 %v157, 2147483648
        %v165 = vsel %vm163, %v164, %v162
        %v166 = vrsqrt.pop %v158
        %v167 = vmul.f32 %v158, %v166
        %vm168 = vcmp.eq.f32.partialorder %v158, inf
        %v169 = vsel %vm168, %v158, %v167
        %vm170 = vcmp.eq.f32.partialorder %v158, 0.0
        %v171 = vand.u32 %v158, 2147483648
        %v172 = vsel %vm170, %v171, %v169
        %v173 = vmul.f32 %v157, %v165
        %v174 = vmul.f32 %v158, %v172
        %v175 = vrsqrt.pop %v173
        %v176 = vrsqrt.pop %v174
        %v177 = vmul.f32 %v153, %v175
        %v178 = vmul.f32 %v154, %v176
        %179 = vst [vmem:[%s150] sm:$0xff] %v177
        %180 = vst [vmem:[%s150 + $0x8] sm:$0xff] %v178
        %s181 = sand.u32 %s68, 1
        %s182 = scalar_lea.sflag [#allocation4], %s181
        %s183 = sand.u32 %s68, 1
        %s184 = smul.addr %s183, 16
        %s185 = scalar_lea.vmem [#allocation5], %s184
        // Predicated region
        $region29: #{tpu_custom_call.1} parent=23 // pred_check
          %p186 = pneg %p78
        $region30: #{tpu_custom_call.1} parent=23 // pred_check_branch
          %188 = sbr.rel (%p186) target = $region32
        $region31: #{tpu_custom_call.1} parent=23 // pred_region
          %s189 = smul.u32 2, %s23
          %s191 = ssub.s32 256, 256
          %192 = vsyncadd %s182, %s191
          %s193 = smul.addr %s22, 2
          %s194 = sadd.s32 %s189, %s193
          %s195 = smul.addr %s194, 128
          %s196 = scalar_lea.hbm %s1, %s195
          %s198 = sshll.u32 %s185, 4
          %s199 = int_to_ptr.vmem [resolvable:$true] %s198
          %201 = dma.vmem_to_hbm [thread:$0]  %s199, 256, %s196, %s182
        $region32: #{tpu_custom_call.1} parent=23 // pred_fallthru
          _
      $region24: #{tpu_custom_call.1} parent=5 // pred_fallthru
        _
      %p202 = scmp.le.s32.totalorder 2, %s13
      // Predicated region
      $region33: #{tpu_custom_call.1} parent=5 // pred_check
        %p203 = pneg %p202
      $region34: #{tpu_custom_call.1} parent=5 // pred_check_branch
        %205 = sbr.rel (%p203) target = $region36
      $region35: #{tpu_custom_call.1} parent=5 // pred_region
        %s206 = ssub.s32 %s13, 2
        // Predicated region
        $region37: #{tpu_custom_call.1} parent=35 // pred_check
          %p207 = pneg %p84
        $region38: #{tpu_custom_call.1} parent=35 // pred_check_branch
          %209 = sbr.rel (%p207) target = $region40
        $region39: #{tpu_custom_call.1} parent=35 // pred_region
          %s210 = sand.u32 %s69, 1
          %s211 = scalar_lea.sflag [#allocation4], %s210
          %s212 = sand.u32 %s69, 1
          %s213 = smul.addr %s212, 16
          %s214 = scalar_lea.vmem [#allocation5], %s213
          %215 = dma.done %s211, 256
        $region40: #{tpu_custom_call.1} parent=35 // pred_fallthru
          _
      $region36: #{tpu_custom_call.1} parent=5 // pred_fallthru
        _
    $region6: #{tpu_custom_call.1} parent=1 // loop_footer
      %s17 = sadd.s32 1, %s13
    $region7: #{tpu_custom_call.1} parent=1 // loop_footer_branch
      %12 = sbr.rel target = $region3
    $region8: #{tpu_custom_call.1} parent=1 // loop_exit
      _
    %216 = vsyncpa [#allocation3], 1
    %s217 = scalar_lea.sflag [#allocation3], 1
    %218 = vsyncpa %s217, 1
    %219 = vsyncpa [#allocation4], 1
    %s220 = scalar_lea.sflag [#allocation4], 1
    %221 = vsyncpa %s220, 1

</llo_original>
